<compile_context>
chip_gen: v6e
topology: v6e:2x2x1
jax: 0.10.0
libtpu: 0.0.40
codegen_flags: <defaults>
</compile_context>

<pallas_src>
import functools

import jax
import jax.numpy as jnp
from jax.experimental import pallas as pl
from jax.experimental.pallas import tpu as pltpu

LANE = 128                          # pad feature dims to multiples of this
_SINGLE_BUFFER_THRESHOLD = 8 << 20  # single-buffer resident weights above this


def _round_up(n, m):
    return (n + m - 1) // m * m


def _device_kind():
    try:
        return jax.devices()[0].device_kind.lower()
    except Exception:
        return ""


def _pick_batch_tile(B, kind):
    """128 on v5e; 256 on v6e/v7x when it keeps the grid a multiple of the
    TensorCore count (v7x has 2 TCs sharing the parallel grid)."""
    B_p = _round_up(max(B, 1), 128)
    if ("v6" in kind) or ("v7" in kind):
        n_tc = 2 if "v7" in kind else 1
        if B_p % 256 == 0 and (B_p // 256) % n_tc == 0:
            return 256
    return 128


# ----------------------------- Pallas kernel --------------------------------
def make_cavia_kernel(n_layers):
    """Fused CAVIA MLP forward: n_layers x (bf16 matmul -> f32 bias -> ReLU)."""

    def kernel(*refs):
        x_ref = refs[0]
        o_ref = refs[-1]
        p = refs[1:-1]                  # (w0, b0, w1, b1, ..., w_{L-1}, b_{L-1})

        h = x_ref[...]                  # bf16 [TB, d_in_pad]
        for k in range(n_layers):
            w_ref = p[2 * k]            # bf16 [d_in_pad, d_out_pad]
            b_ref = p[2 * k + 1]        # f32  [1, d_out_pad]  (= b + ctx @ W_ctx)
            acc = jnp.dot(h, w_ref[...], preferred_element_type=jnp.float32)
            acc = acc + b_ref[...]      # f32 epilogue
            if k < n_layers - 1:
                # ReLU commutes with the down-cast (bit-identical); bf16 max
                # runs on half-width vregs on v6e/v7x.
                h = jnp.maximum(acc.astype(jnp.bfloat16), 0)
            else:
                o_ref[...] = acc.astype(o_ref.dtype)

    return kernel


# ----------------------------- Static (ctx-independent) prep -----------------
def prepare_cavia_static(params, n_in):
    """Split the concat-weight into x / ctx parts, cast, zero-pad. Everything
    here is invariant across CAVIA's inner loop (only ctx changes per call)."""
    n_layers = len(params)
    d_outs = [params[k][0].shape[1] for k in range(n_layers)]
    d_ins = [n_in] + d_outs[:-1]
    d_ins_p = [_round_up(d, LANE) for d in d_ins]
    d_outs_p = [_round_up(d, LANE) for d in d_outs]

    w_x_list, w_c_list, b_list = [], [], []
    for k in range(n_layers):
        wt, b = params[k]
        d_in, d_out = d_ins[k], d_outs[k]

        w_x = wt[:d_in, :]                              # [d_in, d_out]
        w_c = wt[d_in:, :]                              # [ctx,  d_out]

        w_p = jnp.zeros((d_ins_p[k], d_outs_p[k]), jnp.bfloat16)
        w_p = w_p.at[:d_in, :d_out].set(w_x.astype(jnp.bfloat16))

        wc_p = jnp.zeros((w_c.shape[0], d_outs_p[k]), jnp.float32)
        wc_p = wc_p.at[:, :d_out].set(w_c.astype(jnp.float32))

        b_p = jnp.zeros((1, d_outs_p[k]), jnp.float32)
        b_p = b_p.at[:, :d_out].set(b.reshape(1, -1).astype(jnp.float32))

        w_x_list.append(w_p)
        w_c_list.append(wc_p)
        b_list.append(b_p)

    return w_x_list, w_c_list, b_list


# ----------------------------- Forward wrapper (jit this) --------------------
def cavia_forward(x, w_x_list, w_c_list, b_list, context_params, *,
                  batch_tile, n_out, out_dtype=jnp.float32):
    """
    x: [B, n_in] float32
    w_x_list[k]: bf16 [d_in_pad_k, d_out_pad_k]   (padded x-part of layer k)
    w_c_list[k]: f32  [ctx,        d_out_pad_k]   (padded ctx-part of layer k)
    b_list[k]:   f32  [1,          d_out_pad_k]   (padded bias of layer k)
    context_params[k]: [1, ctx] f32
    """
    B, n_in = x.shape
    n_layers = len(w_x_list)
    d_ins_p = [w.shape[0] for w in w_x_list]
    d_outs_p = [w.shape[1] for w in w_x_list]
    B_p = _round_up(max(B, 1), batch_tile)

    # Pad activations; padded rows/cols get sliced off at the end.
    x_p = jnp.zeros((B_p, d_ins_p[0]), jnp.bfloat16)
    x_p = x_p.at[:B, :n_in].set(x.astype(jnp.bfloat16))

    # Resident-weight VMEM footprint -> single-buffer only when it matters
    # (demo shapes stay on the default double-buffered path).
    resident_bytes = sum(w.size * 2 + b.size * 4
                         for w, b in zip(w_x_list, b_list))
    single_buffer = resident_bytes > _SINGLE_BUFFER_THRESHOLD
    const_kwargs = (
        dict(pipeline_mode=pl.Buffered(1)) if single_buffer else {}
    )
    # NOTE: when scaling hidden dims into the multi-MiB range on v7x (64 MiB
    # physical / 32 MiB scoped VMEM), also raise vmem_limit_bytes below.

    flat_inputs = [x_p]
    in_specs = [pl.BlockSpec((batch_tile, d_ins_p[0]), lambda i: (i, 0))]

    for k in range(n_layers):
        ctx = context_params[k].reshape(1, -1).astype(jnp.float32)
        # Exact fold of the concat: eff_b = b + ctx @ W_ctx (f32, batch-invariant).
        eff_b = b_list[k] + ctx @ w_c_list[k]           # [1, d_out_pad_k]

        flat_inputs += [w_x_list[k], eff_b]
        # Weights/biases: constant block -> stay resident in VMEM across the grid.
        in_specs += [
            pl.BlockSpec((d_ins_p[k], d_outs_p[k]), lambda i: (0, 0),
                         **const_kwargs),
            pl.BlockSpec((1, d_outs_p[k]), lambda i: (0, 0),
                         **const_kwargs),
        ]

    out_spec = pl.BlockSpec((batch_tile, d_outs_p[-1]), lambda i: (i, 0))
    grid = (B_p // batch_tile,)

    # Advisory only; padded dims = the work the MXU actually performs
    # (over-states *useful* flops by the pad factor, noted above).
    flops = 2 * B_p * sum(di * do for di, do in zip(d_ins_p, d_outs_p))
    bytes_accessed = int(
        B_p * d_ins_p[0] * 2
        + B_p * d_outs_p[-1] * jnp.dtype(out_dtype).itemsize
        + resident_bytes
    )
    cost = pl.CostEstimate(flops=flops, transcendentals=0,
                           bytes_accessed=bytes_accessed)

    out_p = pl.pallas_call(
        make_cavia_kernel(n_layers),
        out_shape=jax.ShapeDtypeStruct((B_p, d_outs_p[-1]), out_dtype),
        grid=grid,
        in_specs=in_specs,
        out_specs=out_spec,
        compiler_params=pltpu.CompilerParams(
            dimension_semantics=("parallel",)),
        cost_estimate=cost,
    )(*flat_inputs)

    return out_p[:B, :n_out]


# ----------------------------- Param construction ----------------------------
def init_cavia_params(key, n_in, n_out, num_context_params, n_hidden):
    """PyTorch-Linear-like init. Returns transposed weights over concat input."""
    layer_dims = []
    d = n_in
    for h in n_hidden:
        layer_dims.append((d + num_context_params, h))
        d = h
    layer_dims.append((d + num_context_params, n_out))

    params = []
    for (fan_in, fan_out) in layer_dims:
        key, k_w, k_b = jax.random.split(key, 3)
        bound = 1.0 / jnp.sqrt(fan_in)
        wt = jax.random.uniform(k_w, (fan_in, fan_out), jnp.float32,
                                minval=-bound, maxval=bound)
        b = jax.random.uniform(k_b, (1, fan_out), jnp.float32,
                               minval=-bound, maxval=bound)
        params.append((wt, b))

    # reset_context_params(): zeros for every layer
    context_params = [jnp.zeros((1, num_context_params), jnp.float32)
                      for _ in layer_dims]
    return params, context_params


# ----------------------------- Reference (pure JAX, f32) ---------------------
def cavia_forward_ref(x, params, context_params):
    h = x
    n_layers = len(params)
    for k in range(n_layers - 1):
        wt, b = params[k]
        c = jnp.broadcast_to(context_params[k],
                             (h.shape[0], context_params[k].shape[1]))
        hc = jnp.concatenate([h, c], axis=1)
        h = jax.nn.relu(hc @ wt + b)
    wt, b = params[-1]
    c = jnp.broadcast_to(context_params[-1],
                         (h.shape[0], context_params[-1].shape[1]))
    hc = jnp.concatenate([h, c], axis=1)
    return hc @ wt + b


# ----------------------------- Main -------------------------------------------
if __name__ == "__main__":
    key = jax.random.PRNGKey(0)

    # Shapes consistent with the module's forward; batch sized to exercise the
    # batch grid / MXU fill on all generations.
    B = 256
    n_in = 32
    num_context_params = 8
    n_hidden = [64, 32]
    n_out = 16

    key, k_x, k_p = jax.random.split(key, 3)
    x = jax.random.normal(k_x, (B, n_in), jnp.float32)
    params, context_params = init_cavia_params(
        k_p, n_in, n_out, num_context_params, n_hidden)

    # Hoisted, ctx-independent prep (done once per set of network weights).
    w_x_list, w_c_list, b_list = prepare_cavia_static(params, n_in)

    # Per-chip batch tile: 128 on v5e; 256 on v6e; on v7x keep grid % 2 == 0.
    batch_tile = _pick_batch_tile(B, _device_kind())

    fwd = jax.jit(functools.partial(
        cavia_forward, batch_tile=batch_tile, n_out=n_out,
        out_dtype=jnp.float32))

    y = fwd(x, w_x_list, w_c_list, b_list, context_params)
    y = jax.block_until_ready(y)

    y_ref = cavia_forward_ref(x, params, context_params)
    assert y.shape == (B, n_out)
    # bf16 matmul inputs (f32 accumulate) -> loosened tolerance vs f32 reference.
    assert jnp.allclose(y, y_ref, atol=5e-2, rtol=5e-2), "mismatch vs reference"

    print("KERNEL_OK")
</pallas_src>

<mosaic_0001>
module attributes {stable_mosaic.version = 11 : i64} {
  func.func @kernel(%arg0: i32, %arg1: memref<128x128xbf16, #tpu.memory_space<vmem>>, %arg2: memref<128x128xbf16, #tpu.memory_space<vmem>>, %arg3: memref<1x128xf32, #tpu.memory_space<vmem>>, %arg4: memref<128x128xbf16, #tpu.memory_space<vmem>>, %arg5: memref<1x128xf32, #tpu.memory_space<vmem>>, %arg6: memref<128x128xbf16, #tpu.memory_space<vmem>>, %arg7: memref<1x128xf32, #tpu.memory_space<vmem>>, %arg8: memref<128x128xf32, #tpu.memory_space<vmem>>) attributes {dimension_semantics = [#tpu.dimension_semantics<parallel>], iteration_bounds = array<i64: 2>, scalar_prefetch = 0 : i64, scratch_operands = 0 : i64, tpu.core_type = #tpu.core_type<tc>, window_params = [{transform_indices = @transform_0, window_bounds = array<i64: 128, 128>}, {pipeline_mode = #tpu.pipeline_mode<synchronous>, transform_indices = @transform_1, window_bounds = array<i64: 128, 128>}, {pipeline_mode = #tpu.pipeline_mode<synchronous>, transform_indices = @transform_2, window_bounds = array<i64: 1, 128>}, {pipeline_mode = #tpu.pipeline_mode<synchronous>, transform_indices = @transform_3, window_bounds = array<i64: 128, 128>}, {pipeline_mode = #tpu.pipeline_mode<synchronous>, transform_indices = @transform_4, window_bounds = array<i64: 1, 128>}, {pipeline_mode = #tpu.pipeline_mode<synchronous>, transform_indices = @transform_5, window_bounds = array<i64: 128, 128>}, {pipeline_mode = #tpu.pipeline_mode<synchronous>, transform_indices = @transform_6, window_bounds = array<i64: 1, 128>}, {transform_indices = @transform_7, window_bounds = array<i64: 128, 128>}]} {
    %c0 = arith.constant 0 : index
    %c0_0 = arith.constant 0 : index
    %0 = vector.load %arg1[%c0, %c0_0] : memref<128x128xbf16, #tpu.memory_space<vmem>>, vector<128x128xbf16>
    %c0_1 = arith.constant 0 : index
    %c0_2 = arith.constant 0 : index
    %1 = vector.load %arg2[%c0_1, %c0_2] : memref<128x128xbf16, #tpu.memory_space<vmem>>, vector<128x128xbf16>
    %cst = arith.constant dense<0.000000e+00> : vector<128x128xf32>
    %2 = tpu.matmul %0, %1, %cst {dimension_numbers = #tpu.dot_dimension_numbers<[1], [0], [0], [1], [0, 0, 1, 1], [], []>} : vector<128x128xbf16>, vector<128x128xbf16>, vector<128x128xf32> -> vector<128x128xf32>
    %c0_3 = arith.constant 0 : index
    %c0_4 = arith.constant 0 : index
    %3 = vector.load %arg3[%c0_3, %c0_4] : memref<1x128xf32, #tpu.memory_space<vmem>>, vector<1x128xf32>
    %4 = vector.broadcast %3 : vector<1x128xf32> to vector<128x128xf32>
    %5 = arith.addf %2, %4 : vector<128x128xf32>
    %6 = arith.truncf %5 : vector<128x128xf32> to vector<128x128xbf16>
    %cst_5 = arith.constant 0.000000e+00 : bf16
    %7 = vector.broadcast %cst_5 : bf16 to vector<128x128xbf16>
    %8 = arith.maximumf %6, %7 : vector<128x128xbf16>
    %c0_6 = arith.constant 0 : index
    %c0_7 = arith.constant 0 : index
    %9 = vector.load %arg4[%c0_6, %c0_7] : memref<128x128xbf16, #tpu.memory_space<vmem>>, vector<128x128xbf16>
    %cst_8 = arith.constant dense<0.000000e+00> : vector<128x128xf32>
    %10 = tpu.matmul %8, %9, %cst_8 {dimension_numbers = #tpu.dot_dimension_numbers<[1], [0], [0], [1], [0, 0, 1, 1], [], []>} : vector<128x128xbf16>, vector<128x128xbf16>, vector<128x128xf32> -> vector<128x128xf32>
    %c0_9 = arith.constant 0 : index
    %c0_10 = arith.constant 0 : index
    %11 = vector.load %arg5[%c0_9, %c0_10] : memref<1x128xf32, #tpu.memory_space<vmem>>, vector<1x128xf32>
    %12 = vector.broadcast %11 : vector<1x128xf32> to vector<128x128xf32>
    %13 = arith.addf %10, %12 : vector<128x128xf32>
    %14 = arith.truncf %13 : vector<128x128xf32> to vector<128x128xbf16>
    %cst_11 = arith.constant 0.000000e+00 : bf16
    %15 = vector.broadcast %cst_11 : bf16 to vector<128x128xbf16>
    %16 = arith.maximumf %14, %15 : vector<128x128xbf16>
    %c0_12 = arith.constant 0 : index
    %c0_13 = arith.constant 0 : index
    %17 = vector.load %arg6[%c0_12, %c0_13] : memref<128x128xbf16, #tpu.memory_space<vmem>>, vector<128x128xbf16>
    %cst_14 = arith.constant dense<0.000000e+00> : vector<128x128xf32>
    %18 = tpu.matmul %16, %17, %cst_14 {dimension_numbers = #tpu.dot_dimension_numbers<[1], [0], [0], [1], [0, 0, 1, 1], [], []>} : vector<128x128xbf16>, vector<128x128xbf16>, vector<128x128xf32> -> vector<128x128xf32>
    %c0_15 = arith.constant 0 : index
    %c0_16 = arith.constant 0 : index
    %19 = vector.load %arg7[%c0_15, %c0_16] : memref<1x128xf32, #tpu.memory_space<vmem>>, vector<1x128xf32>
    %20 = vector.broadcast %19 : vector<1x128xf32> to vector<128x128xf32>
    %21 = arith.addf %18, %20 : vector<128x128xf32>
    %c0_17 = arith.constant 0 : index
    %c0_18 = arith.constant 0 : index
    %22 = vector.load %arg8[%c0_17, %c0_18] : memref<128x128xf32, #tpu.memory_space<vmem>>, vector<128x128xf32>
    tpu.vector_store %arg8[%c0_17, %c0_18], %21 {strides = array<i32>} : memref<128x128xf32, #tpu.memory_space<vmem>>, vector<128x128xf32>,
    return
  }
  func.func @transform_0(%arg0: i32) -> (i32, i32) {
    %c0_i32 = arith.constant 0 : i32
    %c0_i32_0 = arith.constant 0 : i32
    return %arg0, %c0_i32 : i32, i32
  }
  func.func @transform_1(%arg0: i32) -> (i32, i32) {
    %c0_i32 = arith.constant 0 : i32
    %c0_i32_0 = arith.constant 0 : i32
    %c0_i32_1 = arith.constant 0 : i32
    return %c0_i32, %c0_i32_0 : i32, i32
  }
  func.func @transform_2(%arg0: i32) -> (i32, i32) {
    %c0_i32 = arith.constant 0 : i32
    %c0_i32_0 = arith.constant 0 : i32
    %c0_i32_1 = arith.constant 0 : i32
    return %c0_i32, %c0_i32_0 : i32, i32
  }
  func.func @transform_3(%arg0: i32) -> (i32, i32) {
    %c0_i32 = arith.constant 0 : i32
    %c0_i32_0 = arith.constant 0 : i32
    %c0_i32_1 = arith.constant 0 : i32
    return %c0_i32, %c0_i32_0 : i32, i32
  }
  func.func @transform_4(%arg0: i32) -> (i32, i32) {
    %c0_i32 = arith.constant 0 : i32
    %c0_i32_0 = arith.constant 0 : i32
    %c0_i32_1 = arith.constant 0 : i32
    return %c0_i32, %c0_i32_0 : i32, i32
  }
  func.func @transform_5(%arg0: i32) -> (i32, i32) {
    %c0_i32 = arith.constant 0 : i32
    %c0_i32_0 = arith.constant 0 : i32
    %c0_i32_1 = arith.constant 0 : i32
    return %c0_i32, %c0_i32_0 : i32, i32
  }
  func.func @transform_6(%arg0: i32) -> (i32, i32) {
    %c0_i32 = arith.constant 0 : i32
    %c0_i32_0 = arith.constant 0 : i32
    %c0_i32_1 = arith.constant 0 : i32
    return %c0_i32, %c0_i32_0 : i32, i32
  }
  func.func @transform_7(%arg0: i32) -> (i32, i32) {
    %c0_i32 = arith.constant 0 : i32
    %c0_i32_0 = arith.constant 0 : i32
    return %arg0, %c0_i32 : i32, i32
  }
}

</mosaic_0001>

<llo_original>
// kernel: cavia_forward.1
$region0: #{cavia_forward.1}
  #allocation0 [shape = 'u32[]', space=smem, size = 0x4, offset = 0x4, fixed_abs, tag = 'smem constant byte address 0x4 - core index']
  #allocation1 [shape = 'u32[144,128]{1,0:T(1,128)}', space=vmem, size = 0x12000, scoped, tag = 'internal scratch']
  %s0 = inlined_call_operand.vmem [shape: bf16[256,128], index: 0, kind: input, shape index: {}]
  %s1 = inlined_call_operand.vmem [shape: bf16[128,128], index: 1, kind: input, shape index: {}]
  %s2 = inlined_call_operand.vmem [shape: f32[1,128], index: 2, kind: input, shape index: {}]
  %s3 = inlined_call_operand.vmem [shape: bf16[128,128], index: 3, kind: input, shape index: {}]
  %s4 = inlined_call_operand.vmem [shape: f32[1,128], index: 4, kind: input, shape index: {}]
  %s5 = inlined_call_operand.vmem [shape: bf16[128,128], index: 5, kind: input, shape index: {}]
  %s6 = inlined_call_operand.vmem [shape: f32[1,128], index: 6, kind: input, shape index: {}]
  %s7 = inlined_call_operand.vmem [shape: f32[256,128], index: 7, kind: output, shape index: {}]
  %s8 = sld [smem:[#allocation0]]
  $region61: #{cavia_forward.1} parent=0
    _
  %s10 = ssub.s32 1, %s8
  %s11 = scalar_select 0, %s10, %s8
  loop: start=0, step=1, limit=4
  $region2: #{cavia_forward.1} parent=0 // loop_pre_header
    _
  $region3: #{cavia_forward.1} parent=0 // loop_header
    %s13 = sphi 0, %s17
    %p14 = scmp.ge.s32.totalorder %s13, 4
    %s23 = sphi 0, %s25
    %s26 = sphi 0, %s23
    %s27 = sphi 0, %s26
    %s43 = sphi 0, %s27
    %s47 = sphi 0, %s47
    %s49 = sphi 0, %s47
    %s50 = sphi 0, %s49
    %s64 = sphi 0, %s50
    %s68 = sphi 0, %s68
    %s70 = sphi 0, %s68
    %s71 = sphi 0, %s70
    %s85 = sphi 0, %s71
    %s89 = sphi 0, %s89
    %s91 = sphi 0, %s89
    %s92 = sphi 0, %s91
    %s106 = sphi 0, %s92
    %s110 = sphi 0, %s110
    %s112 = sphi 0, %s110
    %s113 = sphi 0, %s112
    %s127 = sphi 0, %s113
    %s131 = sphi 0, %s131
    %s133 = sphi 0, %s131
    %s134 = sphi 0, %s133
    %s148 = sphi 0, %s134
    %s152 = sphi 0, %s152
    %s154 = sphi 0, %s152
    %s155 = sphi 0, %s154
    %s169 = sphi 0, %s155
    %s175 = sphi 0, %s177
    %s178 = sphi 0, %s175
    %s179 = sphi 0, %s178
    %s195 = sphi 0, %s179
  $region4: #{cavia_forward.1} parent=0 // loop_header_branch
    %16 = sbr.rel (%p14) target = $region8
  $region5: #{cavia_forward.1} parent=0 // loop_body
    %s18 = ssub.s32 %s13, 1
    %s19 = ssub.s32 %s13, 2
    %s20 = sadd.s32 %s13, 1
    %s21 = ssub.s32 %s13, %s20
    %p22 = scmp.eq.s32.totalorder %s21, 0
    %s24 = sadd.s32 %s23, 1
    %s25 = scalar_select %p22, %s23, %s24
    %p28 = pneg %p22
    %p29 = scmp.eq.s32.totalorder %s13, 1
    %p30 = por %p28, %p29
    %p31 = scmp.ne.s32.totalorder %s23, %s26
    %p32 = scmp.eq.s32.totalorder %s13, 0
    %p33 = por %p31, %p32
    %p34 = scmp.ne.s32.totalorder %s23, %s26
    %p35 = scmp.eq.s32.totalorder %s18, 1
    %p36 = por %p34, %p35
    %p37 = scmp.ne.s32.totalorder %s26, %s27
    %p38 = scmp.eq.s32.totalorder %s18, 0
    %p39 = por %p37, %p38
    %p40 = scmp.ne.s32.totalorder %s26, %s27
    %p41 = scmp.eq.s32.totalorder %s19, 1
    %p42 = por %p40, %p41
    %p44 = scmp.ne.s32.totalorder %s27, %s43
    %p45 = scmp.eq.s32.totalorder %s19, 0
    %p46 = por %p44, %p45
    %s48 = sadd.s32 %s47, 1
    %p51 = scmp.eq.s32.totalorder %s13, 1
    %p52 = scmp.ne.s32.totalorder %s47, %s49
    %p53 = scmp.eq.s32.totalorder %s13, 0
    %p54 = por %p52, %p53
    %p55 = scmp.ne.s32.totalorder %s47, %s49
    %p56 = scmp.eq.s32.totalorder %s18, 1
    %p57 = por %p55, %p56
    %p58 = scmp.ne.s32.totalorder %s49, %s50
    %p59 = scmp.eq.s32.totalorder %s18, 0
    %p60 = por %p58, %p59
    %p61 = scmp.ne.s32.totalorder %s49, %s50
    %p62 = scmp.eq.s32.totalorder %s19, 1
    %p63 = por %p61, %p62
    %p65 = scmp.ne.s32.totalorder %s50, %s64
    %p66 = scmp.eq.s32.totalorder %s19, 0
    %p67 = por %p65, %p66
    %s69 = sadd.s32 %s68, 1
    %p72 = scmp.eq.s32.totalorder %s13, 1
    %p73 = scmp.ne.s32.totalorder %s68, %s70
    %p74 = scmp.eq.s32.totalorder %s13, 0
    %p75 = por %p73, %p74
    %p76 = scmp.ne.s32.totalorder %s68, %s70
    %p77 = scmp.eq.s32.totalorder %s18, 1
    %p78 = por %p76, %p77
    %p79 = scmp.ne.s32.totalorder %s70, %s71
    %p80 = scmp.eq.s32.totalorder %s18, 0
    %p81 = por %p79, %p80
    %p82 = scmp.ne.s32.totalorder %s70, %s71
    %p83 = scmp.eq.s32.totalorder %s19, 1
    %p84 = por %p82, %p83
    %p86 = scmp.ne.s32.totalorder %s71, %s85
    %p87 = scmp.eq.s32.totalorder %s19, 0
    %p88 = por %p86, %p87
    %s90 = sadd.s32 %s89, 1
    %p93 = scmp.eq.s32.totalorder %s13, 1
    %p94 = scmp.ne.s32.totalorder %s89, %s91
    %p95 = scmp.eq.s32.totalorder %s13, 0
    %p96 = por %p94, %p95
    %p97 = scmp.ne.s32.totalorder %s89, %s91
    %p98 = scmp.eq.s32.totalorder %s18, 1
    %p99 = por %p97, %p98
    %p100 = scmp.ne.s32.totalorder %s91, %s92
    %p101 = scmp.eq.s32.totalorder %s18, 0
    %p102 = por %p100, %p101
    %p103 = scmp.ne.s32.totalorder %s91, %s92
    %p104 = scmp.eq.s32.totalorder %s19, 1
    %p105 = por %p103, %p104
    %p107 = scmp.ne.s32.totalorder %s92, %s106
    %p108 = scmp.eq.s32.totalorder %s19, 0
    %p109 = por %p107, %p108
    %s111 = sadd.s32 %s110, 1
    %p114 = scmp.eq.s32.totalorder %s13, 1
    %p115 = scmp.ne.s32.totalorder %s110, %s112
    %p116 = scmp.eq.s32.totalorder %s13, 0
    %p117 = por %p115, %p116
    %p118 = scmp.ne.s32.totalorder %s110, %s112
    %p119 = scmp.eq.s32.totalorder %s18, 1
    %p120 = por %p118, %p119
    %p121 = scmp.ne.s32.totalorder %s112, %s113
    %p122 = scmp.eq.s32.totalorder %s18, 0
    %p123 = por %p121, %p122
    %p124 = scmp.ne.s32.totalorder %s112, %s113
    %p125 = scmp.eq.s32.totalorder %s19, 1
    %p126 = por %p124, %p125
    %p128 = scmp.ne.s32.totalorder %s113, %s127
    %p129 = scmp.eq.s32.totalorder %s19, 0
    %p130 = por %p128, %p129
    %s132 = sadd.s32 %s131, 1
    %p135 = scmp.eq.s32.totalorder %s13, 1
    %p136 = scmp.ne.s32.totalorder %s131, %s133
    %p137 = scmp.eq.s32.totalorder %s13, 0
    %p138 = por %p136, %p137
    %p139 = scmp.ne.s32.totalorder %s131, %s133
    %p140 = scmp.eq.s32.totalorder %s18, 1
    %p141 = por %p139, %p140
    %p142 = scmp.ne.s32.totalorder %s133, %s134
    %p143 = scmp.eq.s32.totalorder %s18, 0
    %p144 = por %p142, %p143
    %p145 = scmp.ne.s32.totalorder %s133, %s134
    %p146 = scmp.eq.s32.totalorder %s19, 1
    %p147 = por %p145, %p146
    %p149 = scmp.ne.s32.totalorder %s134, %s148
    %p150 = scmp.eq.s32.totalorder %s19, 0
    %p151 = por %p149, %p150
    %s153 = sadd.s32 %s152, 1
    %p156 = scmp.eq.s32.totalorder %s13, 1
    %p157 = scmp.ne.s32.totalorder %s152, %s154
    %p158 = scmp.eq.s32.totalorder %s13, 0
    %p159 = por %p157, %p158
    %p160 = scmp.ne.s32.totalorder %s152, %s154
    %p161 = scmp.eq.s32.totalorder %s18, 1
    %p162 = por %p160, %p161
    %p163 = scmp.ne.s32.totalorder %s154, %s155
    %p164 = scmp.eq.s32.totalorder %s18, 0
    %p165 = por %p163, %p164
    %p166 = scmp.ne.s32.totalorder %s154, %s155
    %p167 = scmp.eq.s32.totalorder %s19, 1
    %p168 = por %p166, %p167
    %p170 = scmp.ne.s32.totalorder %s155, %s169
    %p171 = scmp.eq.s32.totalorder %s19, 0
    %p172 = por %p170, %p171
    %s173 = ssub.s32 %s13, %s20
    %p174 = scmp.eq.s32.totalorder %s173, 0
    %s176 = sadd.s32 %s175, 1
    %s177 = scalar_select %p174, %s175, %s176
    %p180 = pneg %p174
    %p181 = scmp.eq.s32.totalorder %s13, 1
    %p182 = por %p180, %p181
    %p183 = scmp.ne.s32.totalorder %s175, %s178
    %p184 = scmp.eq.s32.totalorder %s13, 0
    %p185 = por %p183, %p184
    %p186 = scmp.ne.s32.totalorder %s175, %s178
    %p187 = scmp.eq.s32.totalorder %s18, 1
    %p188 = por %p186, %p187
    %p189 = scmp.ne.s32.totalorder %s178, %s179
    %p190 = scmp.eq.s32.totalorder %s18, 0
    %p191 = por %p189, %p190
    %p192 = scmp.ne.s32.totalorder %s178, %s179
    %p193 = scmp.eq.s32.totalorder %s19, 1
    %p194 = por %p192, %p193
    %p196 = scmp.ne.s32.totalorder %s179, %s195
    %p197 = scmp.eq.s32.totalorder %s19, 0
    %p198 = por %p196, %p197
    %p199 = scmp.le.s32.totalorder 1, %s13
    %p200 = scmp.lt.s32.totalorder %s13, 3
    %p201 = pnand %p199, %p200
    %p202 = pneg %p201
    // Predicated region
    $region9: #{cavia_forward.1} parent=5 // pred_check
      _
    $region10: #{cavia_forward.1} parent=5 // pred_check_branch
      %204 = sbr.rel (%p201) target = $region12
    $region11: #{cavia_forward.1} parent=5 // pred_region
      %s205 = ssub.s32 %s13, 1
      // Predicated region
      $region13: #{cavia_forward.1} parent=11 // pred_check
        %p206 = pneg %p60
      $region14: #{cavia_forward.1} parent=11 // pred_check_branch
        %208 = sbr.rel (%p206) target = $region16
      $region15: #{cavia_forward.1} parent=11 // pred_region
        _
      $region16: #{cavia_forward.1} parent=11 // pred_fallthru
        _
      // Predicated region
      $region17: #{cavia_forward.1} parent=11 // pred_check
        %p209 = pneg %p81
      $region18: #{cavia_forward.1} parent=11 // pred_check_branch
        %211 = sbr.rel (%p209) target = $region20
      $region19: #{cavia_forward.1} parent=11 // pred_region
        _
      $region20: #{cavia_forward.1} parent=11 // pred_fallthru
        _
      // Predicated region
      $region21: #{cavia_forward.1} parent=11 // pred_check
        %p212 = pneg %p102
      $region22: #{cavia_forward.1} parent=11 // pred_check_branch
        %214 = sbr.rel (%p212) target = $region24
      $region23: #{cavia_forward.1} parent=11 // pred_region
        _
      $region24: #{cavia_forward.1} parent=11 // pred_fallthru
        _
      // Predicated region
      $region25: #{cavia_forward.1} parent=11 // pred_check
        %p215 = pneg %p123
      $region26: #{cavia_forward.1} parent=11 // pred_check_branch
        %217 = sbr.rel (%p215) target = $region28
      $region27: #{cavia_forward.1} parent=11 // pred_region
        _
      $region28: #{cavia_forward.1} parent=11 // pred_fallthru
        _
      // Predicated region
      $region29: #{cavia_forward.1} parent=11 // pred_check
        %p218 = pneg %p144
      $region30: #{cavia_forward.1} parent=11 // pred_check_branch
        %220 = sbr.rel (%p218) target = $region32
      $region31: #{cavia_forward.1} parent=11 // pred_region
        _
      $region32: #{cavia_forward.1} parent=11 // pred_fallthru
        _
      // Predicated region
      $region33: #{cavia_forward.1} parent=11 // pred_check
        %p221 = pneg %p165
      $region34: #{cavia_forward.1} parent=11 // pred_check_branch
        %223 = sbr.rel (%p221) target = $region36
      $region35: #{cavia_forward.1} parent=11 // pred_region
        _
      $region36: #{cavia_forward.1} parent=11 // pred_fallthru
        _
    $region12: #{cavia_forward.1} parent=5 // pred_fallthru
      _
    %p224 = scmp.lt.s32.totalorder %s13, 2
    // Predicated region
    $region37: #{cavia_forward.1} parent=5 // pred_check
      %p225 = pneg %p224
    $region38: #{cavia_forward.1} parent=5 // pred_check_branch
      %227 = sbr.rel (%p225) target = $region40
    $region39: #{cavia_forward.1} parent=5 // pred_region
      // Predicated region
      $region41: #{cavia_forward.1} parent=39 // pred_check
        %p228 = pneg %p33
      $region42: #{cavia_forward.1} parent=39 // pred_check_branch
        %230 = sbr.rel (%p228) target = $region44
      $region43: #{cavia_forward.1} parent=39 // pred_region
        %s231 = smul.u32 16, %s13
        %p232 = scmp.lt.s32.totalorder %s231, 31
        %s233 = scalar_select %p232, %s231, 31
        %s234 = smul.addr %s233, 4
        %s235 = scalar_lea.vmem %s0, %s234
        %s236 = smul.u32 16, %s13
      $region44: #{cavia_forward.1} parent=39 // pred_fallthru
        _
    $region40: #{cavia_forward.1} parent=5 // pred_fallthru
      _
    %p237 = scmp.le.s32.totalorder 1, %s13
    %p238 = scmp.lt.s32.totalorder %s13, 3
    %p239 = pnand %p237, %p238
    %p240 = pneg %p239
    // Predicated region
    $region45: #{cavia_forward.1} parent=5 // pred_check
      _
    $region46: #{cavia_forward.1} parent=5 // pred_check_branch
      %242 = sbr.rel (%p239) target = $region48
    $region47: #{cavia_forward.1} parent=5 // pred_region
      %s243 = ssub.s32 %s13, 1
      %s244 = smul.u32 16, %s18
      %p245 = scmp.lt.s32.totalorder %s244, 31
      %s246 = scalar_select %p245, %s244, 31
      %s247 = smul.addr %s246, 4
      %s248 = scalar_lea.vmem %s0, %s247
      %p249 = pneg %p39
      %p250 = pneg %p36
      %p251 = pneg %p60
      %p252 = pneg %p57
      %p253 = pneg %p81
      %p254 = pneg %p78
      %p255 = pneg %p102
      %p256 = pneg %p99
      %p257 = pneg %p123
      %p258 = pneg %p120
      %p259 = pneg %p144
      %p260 = pneg %p141
      %p261 = pneg %p165
      %p262 = pneg %p162
      %p263 = pneg %p191
      %p264 = pneg %p188
      %s265 = smul.u32 16, %s18
      %p266 = scmp.lt.s32.totalorder %s265, 31
      %s267 = scalar_select %p266, %s265, 31
      %s268 = smul.addr %s267, 8
      %s269 = scalar_lea.vmem %s7, %s268
      %s270 = smul.u32 16, %s18
      %p271 = scmp.lt.s32.totalorder %s270, 31
      %s272 = scalar_select %p271, %s270, 31
      %s273 = smul.addr %s272, 4
      %s274 = scalar_lea.vmem %s0, %s273
      %s275 = smul.u32 16, %s18
      %s276 = smul.u32 16, %s18
      %p277 = scmp.lt.s32.totalorder %s276, 31
      %s278 = scalar_select %p277, %s276, 31
      %s279 = smul.addr %s278, 8
      %s280 = scalar_lea.vmem %s7, %s279
      %s281 = smul.u32 16, %s18
      %v283 = vld [vmem:[%s274] sm:$0xf]
      %v284 = vld [vmem:[%s274 + $0x4] sm:$0xf]
      %v285 = vld [vmem:[%s274 + $0x8] sm:$0xf]
      %v286 = vld [vmem:[%s274 + $0xc] sm:$0xf]
      %v287 = vld [vmem:[%s274 + $0x10] sm:$0xf]
      %v288 = vld [vmem:[%s274 + $0x14] sm:$0xf]
      %v289 = vld [vmem:[%s274 + $0x18] sm:$0xf]
      %v290 = vld [vmem:[%s274 + $0x1c] sm:$0xf]
      %v291 = vld [vmem:[%s274 + $0x20] sm:$0xf]
      %v292 = vld [vmem:[%s274 + $0x24] sm:$0xf]
      %v293 = vld [vmem:[%s274 + $0x28] sm:$0xf]
      %v294 = vld [vmem:[%s274 + $0x2c] sm:$0xf]
      %v295 = vld [vmem:[%s274 + $0x30] sm:$0xf]
      %v296 = vld [vmem:[%s274 + $0x34] sm:$0xf]
      %v297 = vld [vmem:[%s274 + $0x38] sm:$0xf]
      %v298 = vld [vmem:[%s274 + $0x3c] sm:$0xf]
      %v299 = vld [vmem:[%s1] sm:$0xf]
      %v300 = vld [vmem:[%s1 + $0x4] sm:$0xf]
      %v301 = vld [vmem:[%s1 + $0x8] sm:$0xf]
      %v302 = vld [vmem:[%s1 + $0xc] sm:$0xf]
      %v303 = vld [vmem:[%s1 + $0x10] sm:$0xf]
      %v304 = vld [vmem:[%s1 + $0x14] sm:$0xf]
      %v305 = vld [vmem:[%s1 + $0x18] sm:$0xf]
      %v306 = vld [vmem:[%s1 + $0x1c] sm:$0xf]
      %v307 = vld [vmem:[%s1 + $0x20] sm:$0xf]
      %v308 = vld [vmem:[%s1 + $0x24] sm:$0xf]
      %v309 = vld [vmem:[%s1 + $0x28] sm:$0xf]
      %v310 = vld [vmem:[%s1 + $0x2c] sm:$0xf]
      %v311 = vld [vmem:[%s1 + $0x30] sm:$0xf]
      %v312 = vld [vmem:[%s1 + $0x34] sm:$0xf]
      %v313 = vld [vmem:[%s1 + $0x38] sm:$0xf]
      %v314 = vld [vmem:[%s1 + $0x3c] sm:$0xf]
      %v315 = vld [vmem:[%s2] sm:$0x1]
      %v317 = vlaneseq
      %v318 = vshrl.u32 %v317, 7
      %v319 = vsub.s32 0, %v318
      %v320 = vrot.slane %v315, %v319
      %v338 = vunpack.c.l.b16 %v283
      %v339 = vunpack.c.l.b16 %v284
      %v340 = vunpack.c.l.b16 %v285
      %v341 = vunpack.c.l.b16 %v286
      %v342 = vunpack.c.l.b16 %v287
      %v343 = vunpack.c.l.b16 %v288
      %v344 = vunpack.c.l.b16 %v289
      %v345 = vunpack.c.l.b16 %v290
      %v346 = vunpack.c.l.b16 %v291
      %v347 = vunpack.c.l.b16 %v292
      %v348 = vunpack.c.l.b16 %v293
      %v349 = vunpack.c.l.b16 %v294
      %v350 = vunpack.c.l.b16 %v295
      %v351 = vunpack.c.l.b16 %v296
      %v352 = vunpack.c.l.b16 %v297
      %v353 = vunpack.c.l.b16 %v298
      %v354 = vpack.c.b16 %v339, %v338
      %v355 = vpack.c.b16 %v341, %v340
      %v356 = vpack.c.b16 %v343, %v342
      %v357 = vpack.c.b16 %v345, %v344
      %v358 = vpack.c.b16 %v347, %v346
      %v359 = vpack.c.b16 %v349, %v348
      %v360 = vpack.c.b16 %v351, %v350
      %v361 = vpack.c.b16 %v353, %v352
      %v386 = vunpack.c.l.b16 %v299
      %v387 = vunpack.c.l.b16 %v300
      %v388 = vunpack.c.l.b16 %v301
      %v389 = vunpack.c.l.b16 %v302
      %v390 = vunpack.c.l.b16 %v303
      %v391 = vunpack.c.l.b16 %v304
      %v392 = vunpack.c.l.b16 %v305
      %v393 = vunpack.c.l.b16 %v306
      %v394 = vunpack.c.l.b16 %v307
      %v395 = vunpack.c.l.b16 %v308
      %v396 = vunpack.c.l.b16 %v309
      %v397 = vunpack.c.l.b16 %v310
      %v398 = vunpack.c.l.b16 %v311
      %v399 = vunpack.c.l.b16 %v312
      %v400 = vunpack.c.l.b16 %v313
      %v401 = vunpack.c.l.b16 %v314
      %v402 = vpack.c.b16 %v387, %v386
      %v403 = vpack.c.b16 %v389, %v388
      %v404 = vpack.c.b16 %v391, %v390
      %v405 = vpack.c.b16 %v393, %v392
      %v406 = vpack.c.b16 %v395, %v394
      %v407 = vpack.c.b16 %v397, %v396
      %v408 = vpack.c.b16 %v399, %v398
      %v409 = vpack.c.b16 %v401, %v400
      %418 = vmatprep.subr.bf16.mxu0 0
      %419 = vmatpush1.bf16.msra.mxu0 %v409
      %420 = vmatprep.subr.bf16.mxu0 0
      %421 = vmatpush1.bf16.msra.mxu0 %v408
      %422 = vmatprep.subr.bf16.mxu0 0
      %423 = vmatpush1.bf16.msra.mxu0 %v407
      %424 = vmatprep.subr.bf16.mxu0 0
      %425 = vmatpush1.bf16.msra.mxu0 %v406
      %426 = vmatprep.subr.bf16.mxu0 0
      %427 = vmatpush1.bf16.msra.mxu0 %v405
      %428 = vmatprep.subr.bf16.mxu0 0
      %429 = vmatpush1.bf16.msra.mxu0 %v404
      %430 = vmatprep.subr.bf16.mxu0 0
      %431 = vmatpush1.bf16.msra.mxu0 %v403
      %432 = vmatprep.subr.bf16.mxu0 0
      %433 = vmatpush1.bf16.msra.mxu0 %v402
      %434 = vmatprep.subr.bf16.mxu0 0
      %435 = vmatpush2.bf16.msra.mxu0 0
      %436 = vmatprep.subr.bf16.mxu0 0
      %437 = vmatpush2.bf16.msra.mxu0 0
      %438 = vmatprep.subr.bf16.mxu0 0
      %439 = vmatpush2.bf16.msra.mxu0 0
      %440 = vmatprep.subr.bf16.mxu0 0
      %441 = vmatpush2.bf16.msra.mxu0 0
      %442 = vmatprep.subr.bf16.mxu0 0
      %443 = vmatpush2.bf16.msra.mxu0 0
      %444 = vmatprep.subr.bf16.mxu0 0
      %445 = vmatpush2.bf16.msra.mxu0 0
      %446 = vmatprep.subr.bf16.mxu0 0
      %447 = vmatpush2.bf16.msra.mxu0 0
      %448 = vmatprep.subr.bf16.mxu0 0
      %449 = vmatpush2.bf16.msra.mxu0 0
      %450 = vmatprep.mubr.bf16.mxu0 0
      %451 = vmatmul.mubr.bf16.gmra.mxu0 %v354
      %v452 = vpop.f32.mrf.mxu0
      %v453 = vadd.f32 %v320, %v452
      %v454 = vpop.f32.mrf.mxu0
      %v455 = vpop.f32.mrf.mxu0
      %v456 = vadd.f32 %v320, %v455
      %v457 = vpop.f32.mrf.mxu0
      %458 = vmatprep.mubr.bf16.mxu0 0
      %459 = vmatmul.mubr.bf16.gmra.mxu0 %v355
      %v460 = vpop.f32.mrf.mxu0
      %v461 = vadd.f32 %v320, %v460
      %v462 = vpop.f32.mrf.mxu0
      %v463 = vpop.f32.mrf.mxu0
      %v464 = vadd.f32 %v320, %v463
      %v465 = vpop.f32.mrf.mxu0
      %466 = vmatprep.mubr.bf16.mxu0 0
      %467 = vmatmul.mubr.bf16.gmra.mxu0 %v356
      %v468 = vpop.f32.mrf.mxu0
      %v469 = vadd.f32 %v320, %v468
      %v470 = vpop.f32.mrf.mxu0
      %v471 = vpop.f32.mrf.mxu0
      %v472 = vadd.f32 %v320, %v471
      %v473 = vpop.f32.mrf.mxu0
      %474 = vmatprep.mubr.bf16.mxu0 0
      %475 = vmatmul.mubr.bf16.gmra.mxu0 %v357
      %v476 = vpop.f32.mrf.mxu0
      %v477 = vadd.f32 %v320, %v476
      %v478 = vpop.f32.mrf.mxu0
      %v479 = vpop.f32.mrf.mxu0
      %v480 = vadd.f32 %v320, %v479
      %v481 = vpop.f32.mrf.mxu0
      %482 = vmatprep.mubr.bf16.mxu0 0
      %483 = vmatmul.mubr.bf16.gmra.mxu0 %v358
      %v484 = vpop.f32.mrf.mxu0
      %v485 = vadd.f32 %v320, %v484
      %v486 = vpop.f32.mrf.mxu0
      %v487 = vpop.f32.mrf.mxu0
      %v488 = vadd.f32 %v320, %v487
      %v489 = vpop.f32.mrf.mxu0
      %490 = vmatprep.mubr.bf16.mxu0 0
      %491 = vmatmul.mubr.bf16.gmra.mxu0 %v359
      %v492 = vpop.f32.mrf.mxu0
      %v493 = vadd.f32 %v320, %v492
      %v494 = vpop.f32.mrf.mxu0
      %v495 = vpop.f32.mrf.mxu0
      %v496 = vadd.f32 %v320, %v495
      %v497 = vpop.f32.mrf.mxu0
      %498 = vmatprep.mubr.bf16.mxu0 0
      %499 = vmatmul.mubr.bf16.gmra.mxu0 %v360
      %v500 = vpop.f32.mrf.mxu0
      %v501 = vadd.f32 %v320, %v500
      %v502 = vpop.f32.mrf.mxu0
      %v503 = vpop.f32.mrf.mxu0
      %v504 = vadd.f32 %v320, %v503
      %v505 = vpop.f32.mrf.mxu0
      %506 = vmatprep.mubr.bf16.mxu0 0
      %507 = vmatmul.mubr.bf16.gmra.mxu0 %v361
      %v508 = vpop.f32.mrf.mxu0
      %v509 = vadd.f32 %v320, %v508
      %v510 = vpop.f32.mrf.mxu0
      %v511 = vpop.f32.mrf.mxu0
      %v512 = vadd.f32 %v320, %v511
      %v513 = vpop.f32.mrf.mxu0
      %514 = vdwg.mxu0
      %v515 = vpack.c.bf16 %v456, %v453
      %v516 = vpack.c.bf16 %v464, %v461
      %v517 = vpack.c.bf16 %v472, %v469
      %v518 = vpack.c.bf16 %v480, %v477
      %v519 = vpack.c.bf16 %v488, %v485
      %v520 = vpack.c.bf16 %v496, %v493
      %v521 = vpack.c.bf16 %v504, %v501
      %v522 = vpack.c.bf16 %v512, %v509
      %v523 = vmax.bf16 %v515, 0
      %v524 = vmax.bf16 %v516, 0
      %v525 = vmax.bf16 %v517, 0
      %v526 = vmax.bf16 %v518, 0
      %v527 = vmax.bf16 %v519, 0
      %v528 = vmax.bf16 %v520, 0
      %v529 = vmax.bf16 %v521, 0
      %v530 = vmax.bf16 %v522, 0
      %v531 = vld [vmem:[%s3] sm:$0xf]
      %v532 = vld [vmem:[%s3 + $0x4] sm:$0xf]
      %v533 = vld [vmem:[%s3 + $0x8] sm:$0xf]
      %v534 = vld [vmem:[%s3 + $0xc] sm:$0xf]
      %v535 = vld [vmem:[%s3 + $0x10] sm:$0xf]
      %v536 = vld [vmem:[%s3 + $0x14] sm:$0xf]
      %v537 = vld [vmem:[%s3 + $0x18] sm:$0xf]
      %v538 = vld [vmem:[%s3 + $0x1c] sm:$0xf]
      %v539 = vld [vmem:[%s3 + $0x20] sm:$0xf]
      %v540 = vld [vmem:[%s3 + $0x24] sm:$0xf]
      %v541 = vld [vmem:[%s3 + $0x28] sm:$0xf]
      %v542 = vld [vmem:[%s3 + $0x2c] sm:$0xf]
      %v543 = vld [vmem:[%s3 + $0x30] sm:$0xf]
      %v544 = vld [vmem:[%s3 + $0x34] sm:$0xf]
      %v545 = vld [vmem:[%s3 + $0x38] sm:$0xf]
      %v546 = vld [vmem:[%s3 + $0x3c] sm:$0xf]
      %v547 = vld [vmem:[%s4] sm:$0x1]
      %v549 = vlaneseq
      %v550 = vshrl.u32 %v549, 7
      %v551 = vsub.s32 0, %v550
      %v552 = vrot.slane %v547, %v551
      %v570 = vunpack.c.l.b16 %v531
      %v571 = vunpack.c.l.b16 %v532
      %v572 = vunpack.c.l.b16 %v533
      %v573 = vunpack.c.l.b16 %v534
      %v574 = vunpack.c.l.b16 %v535
      %v575 = vunpack.c.l.b16 %v536
      %v576 = vunpack.c.l.b16 %v537
      %v577 = vunpack.c.l.b16 %v538
      %v578 = vunpack.c.l.b16 %v539
      %v579 = vunpack.c.l.b16 %v540
      %v580 = vunpack.c.l.b16 %v541
      %v581 = vunpack.c.l.b16 %v542
      %v582 = vunpack.c.l.b16 %v543
      %v583 = vunpack.c.l.b16 %v544
      %v584 = vunpack.c.l.b16 %v545
      %v585 = vunpack.c.l.b16 %v546
      %v586 = vpack.c.b16 %v571, %v570
      %v587 = vpack.c.b16 %v573, %v572
      %v588 = vpack.c.b16 %v575, %v574
      %v589 = vpack.c.b16 %v577, %v576
      %v590 = vpack.c.b16 %v579, %v578
      %v591 = vpack.c.b16 %v581, %v580
      %v592 = vpack.c.b16 %v583, %v582
      %v593 = vpack.c.b16 %v585, %v584
      %602 = vmatprep.subr.bf16.mxu0 0
      %603 = vmatpush1.bf16.msra.mxu0 %v593
      %604 = vmatprep.subr.bf16.mxu0 0
      %605 = vmatpush1.bf16.msra.mxu0 %v592
      %606 = vmatprep.subr.bf16.mxu0 0
      %607 = vmatpush1.bf16.msra.mxu0 %v591
      %608 = vmatprep.subr.bf16.mxu0 0
      %609 = vmatpush1.bf16.msra.mxu0 %v590
      %610 = vmatprep.subr.bf16.mxu0 0
      %611 = vmatpush1.bf16.msra.mxu0 %v589
      %612 = vmatprep.subr.bf16.mxu0 0
      %613 = vmatpush1.bf16.msra.mxu0 %v588
      %614 = vmatprep.subr.bf16.mxu0 0
      %615 = vmatpush1.bf16.msra.mxu0 %v587
      %616 = vmatprep.subr.bf16.mxu0 0
      %617 = vmatpush1.bf16.msra.mxu0 %v586
      %618 = vmatprep.subr.bf16.mxu0 0
      %619 = vmatpush2.bf16.msra.mxu0 0
      %620 = vmatprep.subr.bf16.mxu0 0
      %621 = vmatpush2.bf16.msra.mxu0 0
      %622 = vmatprep.subr.bf16.mxu0 0
      %623 = vmatpush2.bf16.msra.mxu0 0
      %624 = vmatprep.subr.bf16.mxu0 0
      %625 = vmatpush2.bf16.msra.mxu0 0
      %626 = vmatprep.subr.bf16.mxu0 0
      %627 = vmatpush2.bf16.msra.mxu0 0
      %628 = vmatprep.subr.bf16.mxu0 0
      %629 = vmatpush2.bf16.msra.mxu0 0
      %630 = vmatprep.subr.bf16.mxu0 0
      %631 = vmatpush2.bf16.msra.mxu0 0
      %632 = vmatprep.subr.bf16.mxu0 0
      %633 = vmatpush2.bf16.msra.mxu0 0
      %634 = vmatprep.mubr.bf16.mxu0 0
      %635 = vmatmul.mubr.bf16.gmra.mxu0 %v523
      %v636 = vpop.f32.mrf.mxu0
      %v637 = vadd.f32 %v552, %v636
      %v638 = vpop.f32.mrf.mxu0
      %v639 = vpop.f32.mrf.mxu0
      %v640 = vadd.f32 %v552, %v639
      %v641 = vpop.f32.mrf.mxu0
      %642 = vmatprep.mubr.bf16.mxu0 0
      %643 = vmatmul.mubr.bf16.gmra.mxu0 %v524
      %v644 = vpop.f32.mrf.mxu0
      %v645 = vadd.f32 %v552, %v644
      %v646 = vpop.f32.mrf.mxu0
      %v647 = vpop.f32.mrf.mxu0
      %v648 = vadd.f32 %v552, %v647
      %v649 = vpop.f32.mrf.mxu0
      %650 = vmatprep.mubr.bf16.mxu0 0
      %651 = vmatmul.mubr.bf16.gmra.mxu0 %v525
      %v652 = vpop.f32.mrf.mxu0
      %v653 = vadd.f32 %v552, %v652
      %v654 = vpop.f32.mrf.mxu0
      %v655 = vpop.f32.mrf.mxu0
      %v656 = vadd.f32 %v552, %v655
      %v657 = vpop.f32.mrf.mxu0
      %658 = vmatprep.mubr.bf16.mxu0 0
      %659 = vmatmul.mubr.bf16.gmra.mxu0 %v526
      %v660 = vpop.f32.mrf.mxu0
      %v661 = vadd.f32 %v552, %v660
      %v662 = vpop.f32.mrf.mxu0
      %v663 = vpop.f32.mrf.mxu0
      %v664 = vadd.f32 %v552, %v663
      %v665 = vpop.f32.mrf.mxu0
      %666 = vmatprep.mubr.bf16.mxu0 0
      %667 = vmatmul.mubr.bf16.gmra.mxu0 %v527
      %v668 = vpop.f32.mrf.mxu0
      %v669 = vadd.f32 %v552, %v668
      %v670 = vpop.f32.mrf.mxu0
      %v671 = vpop.f32.mrf.mxu0
      %v672 = vadd.f32 %v552, %v671
      %v673 = vpop.f32.mrf.mxu0
      %674 = vmatprep.mubr.bf16.mxu0 0
      %675 = vmatmul.mubr.bf16.gmra.mxu0 %v528
      %v676 = vpop.f32.mrf.mxu0
      %v677 = vadd.f32 %v552, %v676
      %v678 = vpop.f32.mrf.mxu0
      %v679 = vpop.f32.mrf.mxu0
      %v680 = vadd.f32 %v552, %v679
      %v681 = vpop.f32.mrf.mxu0
      %682 = vmatprep.mubr.bf16.mxu0 0
      %683 = vmatmul.mubr.bf16.gmra.mxu0 %v529
      %v684 = vpop.f32.mrf.mxu0
      %v685 = vadd.f32 %v552, %v684
      %v686 = vpop.f32.mrf.mxu0
      %v687 = vpop.f32.mrf.mxu0
      %v688 = vadd.f32 %v552, %v687
      %v689 = vpop.f32.mrf.mxu0
      %690 = vmatprep.mubr.bf16.mxu0 0
      %691 = vmatmul.mubr.bf16.gmra.mxu0 %v530
      %v692 = vpop.f32.mrf.mxu0
      %v693 = vadd.f32 %v552, %v692
      %v694 = vpop.f32.mrf.mxu0
      %v695 = vpop.f32.mrf.mxu0
      %v696 = vadd.f32 %v552, %v695
      %v697 = vpop.f32.mrf.mxu0
      %698 = vdwg.mxu0
      %v699 = vpack.c.bf16 %v640, %v637
      %v700 = vpack.c.bf16 %v648, %v645
      %v701 = vpack.c.bf16 %v656, %v653
      %v702 = vpack.c.bf16 %v664, %v661
      %v703 = vpack.c.bf16 %v672, %v669
      %v704 = vpack.c.bf16 %v680, %v677
      %v705 = vpack.c.bf16 %v688, %v685
      %v706 = vpack.c.bf16 %v696, %v693
      %v707 = vmax.bf16 %v699, 0
      %v708 = vmax.bf16 %v700, 0
      %v709 = vmax.bf16 %v701, 0
      %v710 = vmax.bf16 %v702, 0
      %v711 = vmax.bf16 %v703, 0
      %v712 = vmax.bf16 %v704, 0
      %v713 = vmax.bf16 %v705, 0
      %v714 = vmax.bf16 %v706, 0
      %v715 = vld [vmem:[%s5] sm:$0xf]
      %v716 = vld [vmem:[%s5 + $0x4] sm:$0xf]
      %v717 = vld [vmem:[%s5 + $0x8] sm:$0xf]
      %v718 = vld [vmem:[%s5 + $0xc] sm:$0xf]
      %v719 = vld [vmem:[%s5 + $0x10] sm:$0xf]
      %v720 = vld [vmem:[%s5 + $0x14] sm:$0xf]
      %v721 = vld [vmem:[%s5 + $0x18] sm:$0xf]
      %v722 = vld [vmem:[%s5 + $0x1c] sm:$0xf]
      %v723 = vld [vmem:[%s5 + $0x20] sm:$0xf]
      %v724 = vld [vmem:[%s5 + $0x24] sm:$0xf]
      %v725 = vld [vmem:[%s5 + $0x28] sm:$0xf]
      %v726 = vld [vmem:[%s5 + $0x2c] sm:$0xf]
      %v727 = vld [vmem:[%s5 + $0x30] sm:$0xf]
      %v728 = vld [vmem:[%s5 + $0x34] sm:$0xf]
      %v729 = vld [vmem:[%s5 + $0x38] sm:$0xf]
      %v730 = vld [vmem:[%s5 + $0x3c] sm:$0xf]
      %v731 = vld [vmem:[%s6] sm:$0x1]
      %v733 = vlaneseq
      %v734 = vshrl.u32 %v733, 7
      %v735 = vsub.s32 0, %v734
      %v736 = vrot.slane %v731, %v735
      %v754 = vunpack.c.l.b16 %v715
      %v755 = vunpack.c.l.b16 %v716
      %v756 = vunpack.c.l.b16 %v717
      %v757 = vunpack.c.l.b16 %v718
      %v758 = vunpack.c.l.b16 %v719
      %v759 = vunpack.c.l.b16 %v720
      %v760 = vunpack.c.l.b16 %v721
      %v761 = vunpack.c.l.b16 %v722
      %v762 = vunpack.c.l.b16 %v723
      %v763 = vunpack.c.l.b16 %v724
      %v764 = vunpack.c.l.b16 %v725
      %v765 = vunpack.c.l.b16 %v726
      %v766 = vunpack.c.l.b16 %v727
      %v767 = vunpack.c.l.b16 %v728
      %v768 = vunpack.c.l.b16 %v729
      %v769 = vunpack.c.l.b16 %v730
      %v770 = vpack.c.b16 %v755, %v754
      %v771 = vpack.c.b16 %v757, %v756
      %v772 = vpack.c.b16 %v759, %v758
      %v773 = vpack.c.b16 %v761, %v760
      %v774 = vpack.c.b16 %v763, %v762
      %v775 = vpack.c.b16 %v765, %v764
      %v776 = vpack.c.b16 %v767, %v766
      %v777 = vpack.c.b16 %v769, %v768
      %786 = vmatprep.subr.bf16.mxu0 0
      %787 = vmatpush1.bf16.msra.mxu0 %v777
      %788 = vmatprep.subr.bf16.mxu0 0
      %789 = vmatpush1.bf16.msra.mxu0 %v776
      %790 = vmatprep.subr.bf16.mxu0 0
      %791 = vmatpush1.bf16.msra.mxu0 %v775
      %792 = vmatprep.subr.bf16.mxu0 0
      %793 = vmatpush1.bf16.msra.mxu0 %v774
      %794 = vmatprep.subr.bf16.mxu0 0
      %795 = vmatpush1.bf16.msra.mxu0 %v773
      %796 = vmatprep.subr.bf16.mxu0 0
      %797 = vmatpush1.bf16.msra.mxu0 %v772
      %798 = vmatprep.subr.bf16.mxu0 0
      %799 = vmatpush1.bf16.msra.mxu0 %v771
      %800 = vmatprep.subr.bf16.mxu0 0
      %801 = vmatpush1.bf16.msra.mxu0 %v770
      %802 = vmatprep.subr.bf16.mxu0 0
      %803 = vmatpush2.bf16.msra.mxu0 0
      %804 = vmatprep.subr.bf16.mxu0 0
      %805 = vmatpush2.bf16.msra.mxu0 0
      %806 = vmatprep.subr.bf16.mxu0 0
      %807 = vmatpush2.bf16.msra.mxu0 0
      %808 = vmatprep.subr.bf16.mxu0 0
      %809 = vmatpush2.bf16.msra.mxu0 0
      %810 = vmatprep.subr.bf16.mxu0 0
      %811 = vmatpush2.bf16.msra.mxu0 0
      %812 = vmatprep.subr.bf16.mxu0 0
      %813 = vmatpush2.bf16.msra.mxu0 0
      %814 = vmatprep.subr.bf16.mxu0 0
      %815 = vmatpush2.bf16.msra.mxu0 0
      %816 = vmatprep.subr.bf16.mxu0 0
      %817 = vmatpush2.bf16.msra.mxu0 0
      %818 = vmatprep.mubr.bf16.mxu0 0
      %819 = vmatmul.mubr.bf16.gmra.mxu0 %v707
      %v820 = vpop.f32.mrf.mxu0
      %v821 = vadd.f32 %v736, %v820
      %v822 = vpop.f32.mrf.mxu0
      %v823 = vpop.f32.mrf.mxu0
      %v824 = vadd.f32 %v736, %v823
      %v825 = vpop.f32.mrf.mxu0
      %826 = vmatprep.mubr.bf16.mxu0 0
      %827 = vmatmul.mubr.bf16.gmra.mxu0 %v708
      %v828 = vpop.f32.mrf.mxu0
      %v829 = vadd.f32 %v736, %v828
      %v830 = vpop.f32.mrf.mxu0
      %v831 = vpop.f32.mrf.mxu0
      %v832 = vadd.f32 %v736, %v831
      %v833 = vpop.f32.mrf.mxu0
      %834 = vmatprep.mubr.bf16.mxu0 0
      %835 = vmatmul.mubr.bf16.gmra.mxu0 %v709
      %v836 = vpop.f32.mrf.mxu0
      %v837 = vadd.f32 %v736, %v836
      %v838 = vpop.f32.mrf.mxu0
      %v839 = vpop.f32.mrf.mxu0
      %v840 = vadd.f32 %v736, %v839
      %v841 = vpop.f32.mrf.mxu0
      %842 = vmatprep.mubr.bf16.mxu0 0
      %843 = vmatmul.mubr.bf16.gmra.mxu0 %v710
      %v844 = vpop.f32.mrf.mxu0
      %v845 = vadd.f32 %v736, %v844
      %v846 = vpop.f32.mrf.mxu0
      %v847 = vpop.f32.mrf.mxu0
      %v848 = vadd.f32 %v736, %v847
      %v849 = vpop.f32.mrf.mxu0
      %850 = vmatprep.mubr.bf16.mxu0 0
      %851 = vmatmul.mubr.bf16.gmra.mxu0 %v711
      %v852 = vpop.f32.mrf.mxu0
      %v853 = vadd.f32 %v736, %v852
      %v854 = vpop.f32.mrf.mxu0
      %v855 = vpop.f32.mrf.mxu0
      %v856 = vadd.f32 %v736, %v855
      %v857 = vpop.f32.mrf.mxu0
      %858 = vmatprep.mubr.bf16.mxu0 0
      %859 = vmatmul.mubr.bf16.gmra.mxu0 %v712
      %v860 = vpop.f32.mrf.mxu0
      %v861 = vadd.f32 %v736, %v860
      %v862 = vpop.f32.mrf.mxu0
      %v863 = vpop.f32.mrf.mxu0
      %v864 = vadd.f32 %v736, %v863
      %v865 = vpop.f32.mrf.mxu0
      %866 = vmatprep.mubr.bf16.mxu0 0
      %867 = vmatmul.mubr.bf16.gmra.mxu0 %v713
      %v868 = vpop.f32.mrf.mxu0
      %v869 = vadd.f32 %v736, %v868
      %v870 = vpop.f32.mrf.mxu0
      %v871 = vpop.f32.mrf.mxu0
      %v872 = vadd.f32 %v736, %v871
      %v873 = vpop.f32.mrf.mxu0
      %874 = vmatprep.mubr.bf16.mxu0 0
      %875 = vmatmul.mubr.bf16.gmra.mxu0 %v714
      %v876 = vpop.f32.mrf.mxu0
      %v877 = vadd.f32 %v736, %v876
      %v878 = vpop.f32.mrf.mxu0
      %v879 = vpop.f32.mrf.mxu0
      %v880 = vadd.f32 %v736, %v879
      %v881 = vpop.f32.mrf.mxu0
      %882 = vdwg.mxu0
      %883 = vst [vmem:[%s280] sm:$0xff] %v821
      %884 = vst [vmem:[%s280 + $0x8] sm:$0xff] %v824
      %885 = vst [vmem:[%s280 + $0x10] sm:$0xff] %v829
      %886 = vst [vmem:[%s280 + $0x18] sm:$0xff] %v832
      %887 = vst [vmem:[%s280 + $0x20] sm:$0xff] %v837
      %888 = vst [vmem:[%s280 + $0x28] sm:$0xff] %v840
      %889 = vst [vmem:[%s280 + $0x30] sm:$0xff] %v845
      %890 = vst [vmem:[%s280 + $0x38] sm:$0xff] %v848
      %891 = vst [vmem:[%s280 + $0x40] sm:$0xff] %v853
      %892 = vst [vmem:[%s280 + $0x48] sm:$0xff] %v856
      %893 = vst [vmem:[%s280 + $0x50] sm:$0xff] %v861
      %894 = vst [vmem:[%s280 + $0x58] sm:$0xff] %v864
      %895 = vst [vmem:[%s280 + $0x60] sm:$0xff] %v869
      %896 = vst [vmem:[%s280 + $0x68] sm:$0xff] %v872
      %897 = vst [vmem:[%s280 + $0x70] sm:$0xff] %v877
      %898 = vst [vmem:[%s280 + $0x78] sm:$0xff] %v880
      %s899 = smul.u32 16, %s18
      %p900 = scmp.lt.s32.totalorder %s899, 31
      %s901 = scalar_select %p900, %s899, 31
      %s902 = smul.addr %s901, 8
      %s903 = scalar_lea.vmem %s7, %s902
      // Predicated region
      $region49: #{cavia_forward.1} parent=47 // pred_check
        %p904 = pneg %p188
      $region50: #{cavia_forward.1} parent=47 // pred_check_branch
        %906 = sbr.rel (%p904) target = $region52
      $region51: #{cavia_forward.1} parent=47 // pred_region
        %s907 = smul.u32 16, %s18
      $region52: #{cavia_forward.1} parent=47 // pred_fallthru
        _
    $region48: #{cavia_forward.1} parent=5 // pred_fallthru
      _
    %p908 = scmp.le.s32.totalorder 2, %s13
    // Predicated region
    $region53: #{cavia_forward.1} parent=5 // pred_check
      %p909 = pneg %p908
    $region54: #{cavia_forward.1} parent=5 // pred_check_branch
      %911 = sbr.rel (%p909) target = $region56
    $region55: #{cavia_forward.1} parent=5 // pred_region
      %s912 = ssub.s32 %s13, 2
      // Predicated region
      $region57: #{cavia_forward.1} parent=55 // pred_check
        %p913 = pneg %p194
      $region58: #{cavia_forward.1} parent=55 // pred_check_branch
        %915 = sbr.rel (%p913) target = $region60
      $region59: #{cavia_forward.1} parent=55 // pred_region
        %s916 = smul.u32 16, %s19
        %p917 = scmp.lt.s32.totalorder %s916, 31
        %s918 = scalar_select %p917, %s916, 31
        %s919 = smul.addr %s918, 8
        %s920 = scalar_lea.vmem %s7, %s919
      $region60: #{cavia_forward.1} parent=55 // pred_fallthru
        _
    $region56: #{cavia_forward.1} parent=5 // pred_fallthru
      _
  $region6: #{cavia_forward.1} parent=0 // loop_footer
    %s17 = sadd.s32 1, %s13
  $region7: #{cavia_forward.1} parent=0 // loop_footer_branch
    %12 = sbr.rel target = $region3
  $region8: #{cavia_forward.1} parent=0 // loop_exit
    _

</llo_original>
